<compile_context>
chip_gen: v7x
topology: tpu7x:2x2x1
jax: 0.10.0
libtpu: 0.0.40
codegen_flags: <defaults>
</compile_context>

<pallas_src>
import functools

import jax
import jax.numpy as jnp
from jax.experimental import pallas as pl
from jax.experimental.pallas import tpu as pltpu

_SMOOTH = 1e-6
_LANES = 128      # output slab width (lane-dense store)
_CHUNK = 512      # lane chunk for the in-register fold (multiple of 128)
_MAX_TN = 32768   # max lane extent per grid step (multiple of _CHUNK)


def _rows_for_dtype(dtype):
    # Native sublane packing is 8 rows per 32-bit sublane group; use two
    # packed tiles of depth for per-step volume: 16 rows f32, 32 rows bf16.
    packing = max(1, 4 // jnp.dtype(dtype).itemsize)
    return 8 * packing * 2


def _iou_loss_kernel(pred_ref, gt_ref, out_ref, acc_ref, *, n_true, needs_mask):
    """pred_ref/gt_ref: (R, TN) tile; acc_ref: (R, _CHUNK) f32; out_ref: (R, 128)."""
    k = pl.program_id(2)

    @pl.when(k == 0)
    def _init():
        acc_ref[...] = jnp.zeros_like(acc_ref)

    rows, tn = pred_ref.shape
    n_full = tn // _CHUNK
    rem = tn % _CHUNK

    # Global block index along the flattened C*H*W axis and its first column.
    blk = pl.program_id(1) * pl.num_programs(2) + k
    col0 = blk * tn

    def ratio_chunk(lo, width):
        # Chunked loads straight from the refs keep VMEM temporaries tiny
        # (one vreg-sized chain at a time) even with TN = 32768.
        p = pred_ref[:, lo:lo + width].astype(jnp.float32)
        g = gt_ref[:, lo:lo + width].astype(jnp.float32)
        if needs_mask:
            # Partial last block along N: invalid lanes hold garbage from the
            # DMA buffer; force them to exact zero (same as zero padding).
            col = col0 + lo + jax.lax.broadcasted_iota(jnp.int32, (rows, width), 1)
            valid = col < n_true
            p = jnp.where(valid, p, 0.0)
            g = jnp.where(valid, g, 0.0)
        inter = p * g
        union = p + g - inter
        # Exact reciprocal (EUP) keeps us within the 1e-5 reference tolerance.
        return inter * pl.reciprocal(union + _SMOOTH, approx=False)

    if n_full > 0:
        # Pure-VALU add tree over lane chunks; only a (rows, _CHUNK) slab is
        # read-modify-written in scratch per step.
        fold = ratio_chunk(0, _CHUNK)
        for c in range(1, n_full):
            fold = fold + ratio_chunk(c * _CHUNK, _CHUNK)
        acc_ref[...] += fold
    if rem > 0:
        # Tail narrower than a chunk (only when TN equals the full N extent).
        acc_ref[:, :rem] += ratio_chunk(n_full * _CHUNK, rem)

    @pl.when(k == pl.num_programs(2) - 1)
    def _finalize():
        # Single cross-lane (XLU) reduce per (batch tile, N split); write a
        # lane-dense 128-wide slab of the partial row sums.
        row_sum = jnp.sum(acc_ref[...], axis=-1, keepdims=True)       # (R, 1)
        out_ref[...] = jnp.broadcast_to(row_sum, out_ref.shape).astype(out_ref.dtype)


def iou_loss(pred, gt):
    """pred, gt: (B, C, H, W) arrays (f32 or bf16). Returns (B,) float32 loss."""
    assert pred.shape == gt.shape
    B, C, H, W = pred.shape
    N = C * H * W

    # Free reshapes (row-major collapse) - no HBM copy, no padding copy.
    pred2 = pred.reshape(B, N)
    gt2 = gt.reshape(B, N)

    rows = min(B, _rows_for_dtype(pred.dtype))   # full batch if B is small
    bt = pl.cdiv(B, rows)

    TN = min(N, _MAX_TN)                         # full extent or a 128-multiple
    KT = pl.cdiv(N, TN)
    needs_mask = (KT * TN != N)                  # ragged tail along N

    # Split the N reduction across a second "parallel" grid axis when the
    # batch axis alone cannot occupy both v7x TensorCores (no-op cost on
    # single-TC v5e/v6e).  Only done when the split is exact.
    n_splits = 2 if (bt == 1 and KT >= 2 and KT % 2 == 0) else 1
    kps = KT // n_splits

    grid = (bt, n_splits, kps)

    p_item = jnp.dtype(pred.dtype).itemsize
    g_item = jnp.dtype(gt.dtype).itemsize
    cost = pl.CostEstimate(
        flops=7 * B * N,
        transcendentals=B * N,                   # one reciprocal per element
        bytes_accessed=B * N * (p_item + g_item) + B * n_splits * _LANES * 4,
    )

    in_map = lambda b, s, k: (b, s * kps + k)

    out = pl.pallas_call(
        functools.partial(_iou_loss_kernel, n_true=N, needs_mask=needs_mask),
        out_shape=jax.ShapeDtypeStruct((B, n_splits * _LANES), jnp.float32),
        grid_spec=pltpu.PrefetchScalarGridSpec(
            num_scalar_prefetch=0,
            grid=grid,
            in_specs=[
                pl.BlockSpec((rows, TN), in_map),
                pl.BlockSpec((rows, TN), in_map),
            ],
            # Same output block across the reduction axis -> resident block,
            # written once in the finalize branch.
            out_specs=pl.BlockSpec((rows, _LANES), lambda b, s, k: (b, s)),
            scratch_shapes=[pltpu.VMEM((rows, _CHUNK), jnp.float32)],
        ),
        compiler_params=pltpu.CompilerParams(
            dimension_semantics=("parallel", "parallel", "arbitrary"),
            vmem_limit_bytes=32 * 1024 * 1024,   # fits v5e/v6e/v7x ceilings
        ),
        cost_estimate=cost,
    )(pred2, gt2)

    # Combine the per-split partial sums (tiny wrapper op) and finish the mean.
    partial_sums = out.reshape(B, n_splits, _LANES)[:, :, 0]         # (B, n_splits)
    return 1.0 - jnp.sum(partial_sums, axis=1) / jnp.float32(N)


def _reference(pred, gt):
    inter = pred * gt
    union = pred + gt - inter
    return 1.0 - jnp.mean(inter / (union + _SMOOTH), axis=(1, 2, 3))


if __name__ == "__main__":
    key = jax.random.PRNGKey(0)
    k1, k2 = jax.random.split(key)
    B, C, H, W = 2, 4, 16, 16
    # sigmoid to mimic probability-like predictions / soft masks
    pred = jax.nn.sigmoid(jax.random.normal(k1, (B, C, H, W), dtype=jnp.float32))
    gt = (jax.random.uniform(k2, (B, C, H, W), dtype=jnp.float32) > 0.5).astype(
        jnp.float32
    )

    loss = iou_loss(pred, gt)
    loss = jax.block_until_ready(loss)

    ref = _reference(pred, gt)
    assert loss.shape == (B,)
    assert jnp.allclose(loss, ref, atol=1e-5, rtol=1e-5), (loss, ref)

    print("KERNEL_OK")
</pallas_src>

<mosaic_0001>
module attributes {stable_mosaic.version = 11 : i64} {
  func.func @_iou_loss_kernel(%arg0: i32, %arg1: i32, %arg2: i32, %arg3: memref<2x1024xf32, #tpu.memory_space<vmem>>, %arg4: memref<2x1024xf32, #tpu.memory_space<vmem>>, %arg5: memref<2x128xf32, #tpu.memory_space<vmem>>, %arg6: memref<2x512xf32, #tpu.memory_space<vmem>>) attributes {dimension_semantics = [#tpu.dimension_semantics<parallel>, #tpu.dimension_semantics<parallel>, #tpu.dimension_semantics<arbitrary>], iteration_bounds = array<i64: 1, 1, 1>, scalar_prefetch = 0 : i64, scratch_operands = 1 : i64, tpu.core_type = #tpu.core_type<tc>, window_params = [{transform_indices = @transform_0, window_bounds = array<i64: 2, 1024>}, {transform_indices = @transform_1, window_bounds = array<i64: 2, 1024>}, {transform_indices = @transform_2, window_bounds = array<i64: 2, 128>}]} {
    %c0_i32 = arith.constant 0 : i32
    %0 = arith.cmpi eq, %arg2, %c0_i32 : i32
    %1 = arith.extui %0 : i1 to i32
    %c0_i32_0 = arith.constant 0 : i32
    %2 = arith.cmpi ne, %1, %c0_i32_0 : i32
    scf.if %2 {
      %cst_14 = arith.constant 0.000000e+00 : f32
      %28 = vector.broadcast %cst_14 : f32 to vector<2x512xf32>
      %c0_15 = arith.constant 0 : index
      %c0_16 = arith.constant 0 : index
      %29 = vector.load %arg6[%c0_15, %c0_16] : memref<2x512xf32, #tpu.memory_space<vmem>>, vector<2x512xf32>
      tpu.vector_store %arg6[%c0_15, %c0_16], %28 {strides = array<i32>} : memref<2x512xf32, #tpu.memory_space<vmem>>, vector<2x512xf32>,
    } else {
    }
    %c0 = arith.constant 0 : index
    %c0_1 = arith.constant 0 : index
    %3 = vector.load %arg3[%c0, %c0_1] : memref<2x1024xf32, #tpu.memory_space<vmem>>, vector<2x512xf32>
    %c0_2 = arith.constant 0 : index
    %c0_3 = arith.constant 0 : index
    %4 = vector.load %arg4[%c0_2, %c0_3] : memref<2x1024xf32, #tpu.memory_space<vmem>>, vector<2x512xf32>
    %5 = arith.mulf %3, %4 : vector<2x512xf32>
    %6 = arith.addf %3, %4 : vector<2x512xf32>
    %7 = arith.subf %6, %5 : vector<2x512xf32>
    %cst = arith.constant 9.99999997E-7 : f32
    %8 = vector.broadcast %cst : f32 to vector<2x512xf32>
    %9 = arith.addf %7, %8 : vector<2x512xf32>
    %10 = tpu.reciprocal %9 : vector<2x512xf32> -> vector<2x512xf32>
    %11 = arith.mulf %5, %10 : vector<2x512xf32>
    %c0_4 = arith.constant 0 : index
    %c512 = arith.constant 512 : index
    %12 = vector.load %arg3[%c0_4, %c512] : memref<2x1024xf32, #tpu.memory_space<vmem>>, vector<2x512xf32>
    %c0_5 = arith.constant 0 : index
    %c512_6 = arith.constant 512 : index
    %13 = vector.load %arg4[%c0_5, %c512_6] : memref<2x1024xf32, #tpu.memory_space<vmem>>, vector<2x512xf32>
    %14 = arith.mulf %12, %13 : vector<2x512xf32>
    %15 = arith.addf %12, %13 : vector<2x512xf32>
    %16 = arith.subf %15, %14 : vector<2x512xf32>
    %cst_7 = arith.constant 9.99999997E-7 : f32
    %17 = vector.broadcast %cst_7 : f32 to vector<2x512xf32>
    %18 = arith.addf %16, %17 : vector<2x512xf32>
    %19 = tpu.reciprocal %18 : vector<2x512xf32> -> vector<2x512xf32>
    %20 = arith.mulf %14, %19 : vector<2x512xf32>
    %21 = arith.addf %11, %20 : vector<2x512xf32>
    %c0_8 = arith.constant 0 : index
    %c0_9 = arith.constant 0 : index
    %22 = vector.load %arg6[%c0_8, %c0_9] : memref<2x512xf32, #tpu.memory_space<vmem>>, vector<2x512xf32>
    %23 = arith.addf %22, %21 : vector<2x512xf32>
    %c0_10 = arith.constant 0 : index
    %c0_11 = arith.constant 0 : index
    %24 = vector.load %arg6[%c0_10, %c0_11] : memref<2x512xf32, #tpu.memory_space<vmem>>, vector<2x512xf32>
    tpu.vector_store %arg6[%c0_10, %c0_11], %23 {strides = array<i32>} : memref<2x512xf32, #tpu.memory_space<vmem>>, vector<2x512xf32>,
    %c0_i32_12 = arith.constant 0 : i32
    %25 = arith.cmpi eq, %arg2, %c0_i32_12 : i32
    %26 = arith.extui %25 : i1 to i32
    %c0_i32_13 = arith.constant 0 : i32
    %27 = arith.cmpi ne, %26, %c0_i32_13 : i32
    scf.if %27 {
      %c0_14 = arith.constant 0 : index
      %c0_15 = arith.constant 0 : index
      %28 = vector.load %arg6[%c0_14, %c0_15] : memref<2x512xf32, #tpu.memory_space<vmem>>, vector<2x512xf32>
      %cst_16 = arith.constant dense<0.000000e+00> : vector<2xf32>
      %29 = vector.multi_reduction <add>, %28, %cst_16 [1] : vector<2x512xf32> to vector<2xf32>
      %30 = vector.shape_cast %29 : vector<2xf32> to vector<2x1xf32>
      %31 = vector.shape_cast %30 : vector<2x1xf32> to vector<2x1xf32>
      %32 = vector.broadcast %31 : vector<2x1xf32> to vector<2x128xf32>
      %c0_17 = arith.constant 0 : index
      %c0_18 = arith.constant 0 : index
      %33 = vector.load %arg5[%c0_17, %c0_18] : memref<2x128xf32, #tpu.memory_space<vmem>>, vector<2x128xf32>
      tpu.vector_store %arg5[%c0_17, %c0_18], %32 {strides = array<i32>} : memref<2x128xf32, #tpu.memory_space<vmem>>, vector<2x128xf32>,
    } else {
    }
    return
  }
  func.func @transform_0(%arg0: i32, %arg1: i32, %arg2: i32) -> (i32, i32) {
    %c1_i32 = arith.constant 1 : i32
    %0 = arith.muli %arg1, %c1_i32 : i32
    %1 = arith.addi %0, %arg2 : i32
    %c0_i32 = arith.constant 0 : i32
    return %arg0, %1 : i32, i32
  }
  func.func @transform_1(%arg0: i32, %arg1: i32, %arg2: i32) -> (i32, i32) {
    %c1_i32 = arith.constant 1 : i32
    %0 = arith.muli %arg1, %c1_i32 : i32
    %1 = arith.addi %0, %arg2 : i32
    %c0_i32 = arith.constant 0 : i32
    return %arg0, %1 : i32, i32
  }
  func.func @transform_2(%arg0: i32, %arg1: i32, %arg2: i32) -> (i32, i32) {
    %c0_i32 = arith.constant 0 : i32
    return %arg0, %arg1 : i32, i32
  }
}

</mosaic_0001>

<llo_original>
// kernel: tpu_custom_call.1
$region0: #{tpu_custom_call.1}
  #allocation0 [shape = 'u32[]', space=smem, size = 0x4, offset = 0x4, fixed_abs, tag = 'smem constant byte address 0x4 - core index']
  #allocation1 [shape = 'u32[144,128]{1,0:T(1,128)}', space=vmem, size = 0x12000, scoped, tag = 'internal scratch']
  #allocation2 [shape = 'f32[2,512]{1,0:T(2,128)}', space=vmem, size = 0x1000, scoped, tag = 'scratch operand']
  %s0 = inlined_call_operand.hbm [shape: f32[2,1024], index: 0, kind: input, shape index: {}]
  %s1 = inlined_call_operand.hbm [shape: f32[2,1024], index: 1, kind: input, shape index: {}]
  %s2 = inlined_call_operand.hbm [shape: f32[2,128], index: 2, kind: output, shape index: {}]
  %s3 = sld [smem:[#allocation0]]
  $region34: #{tpu_custom_call.1} parent=0
    _
  %s5 = ssub.s32 1, %s3
  %s6 = scalar_select 0, %s5, %s3
  $region1: #{tpu_custom_call.1} parent=0
    #allocation3 [shape = 'u8[8192]{0}', space=vmem, size = 0x2000, scoped, tag = 'input window, operand 0, single buffered']
    #allocation4 [shape = 's32[1]{0}', space=sflag, size = 0x4, scoped, tag = 'scoped memory for tpu_custom_call.1']
    #allocation5 [shape = 's32[1]{0}', space=sflag, size = 0x4, scoped, tag = 'scoped memory for tpu_custom_call.1']
    #allocation6 [shape = 'u8[8192]{0}', space=vmem, size = 0x2000, scoped, tag = 'input window, operand 1, single buffered']
    #allocation7 [shape = 's32[1]{0}', space=sflag, size = 0x4, scoped, tag = 'scoped memory for tpu_custom_call.1']
    #allocation8 [shape = 'u8[1024]{0}', space=vmem, size = 0x400, scoped, tag = 'output window, operand 0, single buffered']
    %7 = vsyncpa [#allocation4], 0
    %8 = vsyncpa [#allocation7], 0
    %9 = vsyncpa [#allocation5], 0
    // Predicated region
    $region2: #{tpu_custom_call.1} parent=1 // pred_check
      _
    $region3: #{tpu_custom_call.1} parent=1 // pred_check_branch
      %11 = sbr.rel (0) target = $region5
    $region4: #{tpu_custom_call.1} parent=1 // pred_region
      %s12 = sadd.s32 0, 0
      %s13 = smul.u32 8, %s12
      %s15 = ssub.s32 256, 256
      %16 = vsyncadd [#allocation4], %s15
      %s17 = smul.addr %s13, 32
      %s18 = scalar_lea.hbm %s0, %s17
      %s20 = sshll.u32 [#allocation3], 4
      %s21 = int_to_ptr.vmem [resolvable:$true] %s20
      %23 = dma.hbm_to_vmem [thread:$0]  %s18, 256, %s21, [#allocation4]
    $region5: #{tpu_custom_call.1} parent=1 // pred_fallthru
      _
    // Predicated region
    $region6: #{tpu_custom_call.1} parent=1 // pred_check
      _
    $region7: #{tpu_custom_call.1} parent=1 // pred_check_branch
      %25 = sbr.rel (0) target = $region9
    $region8: #{tpu_custom_call.1} parent=1 // pred_region
      %s26 = sadd.s32 0, 0
      %s27 = smul.u32 8, %s26
      %s29 = ssub.s32 256, 256
      %30 = vsyncadd [#allocation7], %s29
      %s31 = smul.addr %s27, 32
      %s32 = scalar_lea.hbm %s1, %s31
      %s34 = sshll.u32 [#allocation6], 4
      %s35 = int_to_ptr.vmem [resolvable:$true] %s34
      %37 = dma.hbm_to_vmem [thread:$0]  %s32, 256, %s35, [#allocation7]
    $region9: #{tpu_custom_call.1} parent=1 // pred_fallthru
      _
    // Predicated region
    $region10: #{tpu_custom_call.1} parent=1 // pred_check
      _
    $region11: #{tpu_custom_call.1} parent=1 // pred_check_branch
      %39 = sbr.rel (0) target = $region13
    $region12: #{tpu_custom_call.1} parent=1 // pred_region
      %40 = dma.done [#allocation4], 256
    $region13: #{tpu_custom_call.1} parent=1 // pred_fallthru
      _
    // Predicated region
    $region14: #{tpu_custom_call.1} parent=1 // pred_check
      _
    $region15: #{tpu_custom_call.1} parent=1 // pred_check_branch
      %42 = sbr.rel (0) target = $region17
    $region16: #{tpu_custom_call.1} parent=1 // pred_region
      %43 = dma.done [#allocation7], 256
    $region17: #{tpu_custom_call.1} parent=1 // pred_fallthru
      _
    %s44 = sadd.s32 0, 0
    %s45 = smul.u32 8, %s44
    %s46 = sadd.s32 0, 0
    %s47 = smul.u32 8, %s46
    %p48 = scmp.eq.s32.totalorder 0, 0
    // Predicated region
    $region18: #{tpu_custom_call.1} parent=1 // pred_check
      %p49 = pneg %p48
    $region19: #{tpu_custom_call.1} parent=1 // pred_check_branch
      %51 = sbr.rel (%p49) target = $region21
    $region20: #{tpu_custom_call.1} parent=1 // pred_region
      %52 = vst [vmem:[#allocation2] sm:$0xff] 0.0
    $region21: #{tpu_custom_call.1} parent=1 // pred_fallthru
      _
    %v53 = vld [vmem:[#allocation3] sm:$0xff]
    %v54 = vld [vmem:[#allocation6] sm:$0xff]
    %v55 = vmul.f32 %v53, %v54
    %v56 = vadd.f32 %v53, %v54
    %v57 = vsub.f32 %v56, %v55
    %v58 = vadd.f32 %v57, 1e-06
    %v59 = vrcp.pop %v58
    %v60 = vmul.f32 %v55, %v59
    %v61 = vld [vmem:[#allocation3 + $0x8] sm:$0xff]
    %v62 = vld [vmem:[#allocation6 + $0x8] sm:$0xff]
    %v63 = vmul.f32 %v61, %v62
    %v64 = vadd.f32 %v61, %v62
    %v65 = vsub.f32 %v64, %v63
    %v66 = vadd.f32 %v65, 1e-06
    %v67 = vrcp.pop %v66
    %v68 = vmul.f32 %v63, %v67
    %v69 = vadd.f32 %v60, %v68
    %v70 = vld [vmem:[#allocation2] sm:$0xff]
    %v71 = vadd.f32 %v70, %v69
    %72 = vst [vmem:[#allocation2] sm:$0xff] %v71
    // Predicated region
    $region22: #{tpu_custom_call.1} parent=1 // pred_check
      %p73 = pneg %p48
    $region23: #{tpu_custom_call.1} parent=1 // pred_check_branch
      %75 = sbr.rel (%p73) target = $region25
    $region24: #{tpu_custom_call.1} parent=1 // pred_region
      %v76 = vld [vmem:[#allocation2] sm:$0xff]
      %v78 = vcombine.high %v76, %v76
      %v80 = vunpack.c.l.s4 1983009808
      %v81 = vunpack.c.0.s8 %v80
      %v82 = vlaneseq
      %v83 = vshrl.u32 %v82, 7
      %v84 = vsub.s32 %v81, %v83
      %v85 = vrot.slane %v76, %v84
      %v87 = vunpack.c.l.s4 1983009808
      %v88 = vunpack.c.0.s8 %v87
      %v89 = vlaneseq
      %v90 = vshrl.u32 %v89, 7
      %v91 = vsub.s32 %v88, %v90
      %v92 = vrot.slane %v78, %v91
      %v93 = vcombine.high %v85, %v85
      %v94 = vcombine.high %v92, %v92
      %vm99 = vcmask 1041408
      %v100 = vsel %vm99, %v85, 0.0
      %v101 = vsel %vm99, %v93, 0.0
      %v102 = vadd.f32 %v100, %v101
      %v103 = vsel %vm99, %v92, 0.0
      %v104 = vadd.f32 %v102, %v103
      %v105 = vsel %vm99, %v94, 0.0
      %v106 = vadd.f32 %v104, %v105
      %107 = vadd.xlane.f32.xlu0 %v106
      %v108 = vpop.xlane.xlu0 %107
      %109 = vst [vmem:[#allocation8] sm:$0x3] %v108
    $region25: #{tpu_custom_call.1} parent=1 // pred_fallthru
      _
    // Predicated region
    $region26: #{tpu_custom_call.1} parent=1 // pred_check
      _
    $region27: #{tpu_custom_call.1} parent=1 // pred_check_branch
      %111 = sbr.rel (0) target = $region29
    $region28: #{tpu_custom_call.1} parent=1 // pred_region
      %s113 = ssub.s32 32, 32
      %114 = vsyncadd [#allocation5], %s113
      %s116 = sshll.u32 [#allocation8], 4
      %s117 = int_to_ptr.vmem [resolvable:$true] %s116
      %119 = dma.vmem_to_hbm [thread:$0]  %s117, 32, %s2, [#allocation5]
    $region29: #{tpu_custom_call.1} parent=1 // pred_fallthru
      _
    // Predicated region
    $region30: #{tpu_custom_call.1} parent=1 // pred_check
      _
    $region31: #{tpu_custom_call.1} parent=1 // pred_check_branch
      %121 = sbr.rel (0) target = $region33
    $region32: #{tpu_custom_call.1} parent=1 // pred_region
      %122 = dma.done [#allocation5], 32
    $region33: #{tpu_custom_call.1} parent=1 // pred_fallthru
      _
    %123 = vsyncpa [#allocation4], 1
    %124 = vsyncpa [#allocation7], 1
    %125 = vsyncpa [#allocation5], 1

</llo_original>
